<compile_context>
chip_gen: v7x
topology: tpu7x:2x2x1
jax: 0.10.0
libtpu: 0.0.40
codegen_flags: <defaults>
</compile_context>

<pallas_src>
import functools

import jax
import jax.numpy as jnp
from jax.experimental import pallas as pl
from jax.experimental.pallas import tpu as pltpu


def _round_up(n, m):
    return ((n + m - 1) // m) * m


def mlp_kernel(xT_ref, w1_ref, b1_ref, w2_ref, b2_ref, w3_ref, b3_ref, oT_ref):
    # One grid step == TB batch columns (batch lives on the 128-lane axis).
    # Weights/biases have constant index_maps -> same VMEM-resident blocks every step.
    xT = xT_ref[...]                                                      # (F, TB) f32

    # fc1 + ReLU (dropout = identity at inference); bias (50,1) broadcasts over lanes.
    h1 = jnp.dot(w1_ref[...], xT, preferred_element_type=jnp.float32) + b1_ref[...]
    h1 = jnp.maximum(h1, 0.0)                                             # (50, TB)

    # fc2 + ReLU (dropout = identity at inference)
    h2 = jnp.dot(w2_ref[...], h1, preferred_element_type=jnp.float32) + b2_ref[...]
    h2 = jnp.maximum(h2, 0.0)                                             # (25, TB)

    # fc3 (no activation); lane-dense unmasked store of (n_out, TB).
    out = jnp.dot(w3_ref[...], h2, preferred_element_type=jnp.float32) + b3_ref[...]
    oT_ref[...] = out.astype(oT_ref.dtype)                                # (n_out, TB)


@functools.partial(jax.jit, static_argnames=("num_steps",))
def stock_predictor_forward(x, params, *, num_steps=1):
    """x: (B, ...) float32, flattened to (B, F) like nn.Flatten.
    params: PyTorch-native (out, in) weights and (out, 1) column biases.
    num_steps: grid steps over the batch-lane axis (1 for v5e/v6e; 2 on v7x to use
    both TensorCores when B is large)."""
    x = x.reshape(x.shape[0], -1)                 # nn.Flatten(); no-op for 2-D input
    B, F = x.shape
    xT = x.T                                      # (F, B): batch on lanes (cheap for small F)

    w1, b1 = params["w1"], params["b1"]           # (50, F),   (50, 1)
    w2, b2 = params["w2"], params["b2"]           # (25, 50),  (25, 1)
    w3, b3 = params["w3"], params["b3"]           # (n_out,25),(n_out,1)
    n_out = w3.shape[0]

    # Grid: one fat step by default (per-step overhead dominates this tiny model).
    # For num_steps > 1 the batch-lane tile must be a multiple of 128; the trailing
    # partial block (if any) is masked by Pallas, so no jnp.pad / output slice needed.
    if num_steps <= 1 or B <= 128:
        tb = B
        grid = (1,)
    else:
        tb = _round_up(pl.cdiv(B, num_steps), 128)
        grid = (pl.cdiv(B, tb),)

    cost = pl.CostEstimate(
        flops=2 * B * (F * w1.shape[0] + w1.shape[0] * w2.shape[0] + w2.shape[0] * n_out),
        transcendentals=0,
        bytes_accessed=4 * (xT.size + B * n_out + w1.size + w2.size + w3.size
                            + b1.size + b2.size + b3.size),
    )

    const = lambda i: (0, 0)   # weights/biases: same block every grid step (VMEM-resident)

    outT = pl.pallas_call(
        mlp_kernel,
        out_shape=jax.ShapeDtypeStruct((n_out, B), jnp.float32),
        grid=grid,
        in_specs=[
            pl.BlockSpec((F, tb), lambda i: (0, i)),   # x^T: one lane-dense batch tile/step
            pl.BlockSpec(w1.shape, const),
            pl.BlockSpec(b1.shape, const),
            pl.BlockSpec(w2.shape, const),
            pl.BlockSpec(b2.shape, const),
            pl.BlockSpec(w3.shape, const),
            pl.BlockSpec(b3.shape, const),
        ],
        out_specs=pl.BlockSpec((n_out, tb), lambda i: (0, i)),
        compiler_params=pltpu.CompilerParams(
            dimension_semantics=("parallel",),   # batch-lane steps shard across TCs on v7x
            vmem_limit_bytes=32 * 1024 * 1024,   # explicit (v5e scoped default is 16 MiB)
        ),
        cost_estimate=cost,
    )(xT, w1, b1, w2, b2, w3, b3)

    return outT.T                                 # (B, n_out), matching the PyTorch module


def init_params(key, n_features, n_dependent):
    """Deterministic PyTorch-style init. Weights stay PyTorch-native (out, in); biases are
    stored as (out, 1) columns so they broadcast over the batch-lane axis in the kernel.
    The module's `self.bias` Parameter is never used in forward(), so it is not allocated."""
    def linear(key, fan_in, fan_out):
        kw, kb = jax.random.split(key)
        bound = 1.0 / jnp.sqrt(fan_in)
        w = jax.random.uniform(kw, (fan_out, fan_in), jnp.float32, -bound, bound)
        b = jax.random.uniform(kb, (fan_out, 1), jnp.float32, -bound, bound)
        return w, b

    k1, k2, k3 = jax.random.split(key, 3)
    w1, b1 = linear(k1, n_features, 50)
    w2, b2 = linear(k2, 50, 25)
    w3, b3 = linear(k3, 25, n_dependent)
    return {"w1": w1, "b1": b1, "w2": w2, "b2": b2, "w3": w3, "b3": b3}


def reference_forward(x, p):
    # Pure-JAX f32 reference mirroring the PyTorch forward (dropout = identity at inference).
    # TODO(synk): training-mode dropout is not modeled (inference identity only).
    x = x.reshape(x.shape[0], -1)
    h1 = jnp.maximum(x @ p["w1"].T + p["b1"].T, 0.0)
    h2 = jnp.maximum(h1 @ p["w2"].T + p["b2"].T, 0.0)
    return h2 @ p["w3"].T + p["b3"].T


if __name__ == "__main__":
    key = jax.random.PRNGKey(0)
    kx, kx2, kp = jax.random.split(key, 3)

    B = 8            # batch
    N_FEATURES = 8   # len(config.FEATURES)
    N_DEP = 4        # len(config.DEPENDENT_VARIABLES)

    # Input is already (B, F); nn.Flatten() on 2-D input is a no-op.
    x = jax.random.normal(kx, (B, N_FEATURES), jnp.float32)
    params = init_params(kp, N_FEATURES, N_DEP)

    out = jax.block_until_ready(stock_predictor_forward(x, params))
    assert out.shape == (B, N_DEP)
    assert jnp.allclose(out, reference_forward(x, params), atol=1e-3, rtol=1e-3)

    # Larger, ragged batch: exercises the multi-step grid (parallel batch-lane axis,
    # masked trailing block -- v7x two-TC path) without any jnp.pad or output slice.
    B2 = 1000
    x2 = jax.random.normal(kx2, (B2, N_FEATURES), jnp.float32)
    ref2 = reference_forward(x2, params)
    out2 = jax.block_until_ready(stock_predictor_forward(x2, params))                # grid=(1,)
    out2p = jax.block_until_ready(stock_predictor_forward(x2, params, num_steps=2))  # grid=(2,)
    assert out2.shape == (B2, N_DEP) and out2p.shape == (B2, N_DEP)
    assert jnp.allclose(out2, ref2, atol=1e-3, rtol=1e-3)
    assert jnp.allclose(out2p, ref2, atol=1e-3, rtol=1e-3)

    print("KERNEL_OK")
</pallas_src>

<mosaic_0001>
module attributes {stable_mosaic.version = 11 : i64} {
  func.func @mlp_kernel(%arg0: i32, %arg1: memref<8x8xf32, #tpu.memory_space<vmem>>, %arg2: memref<50x8xf32, #tpu.memory_space<vmem>>, %arg3: memref<50x1xf32, #tpu.memory_space<vmem>>, %arg4: memref<25x50xf32, #tpu.memory_space<vmem>>, %arg5: memref<25x1xf32, #tpu.memory_space<vmem>>, %arg6: memref<4x25xf32, #tpu.memory_space<vmem>>, %arg7: memref<4x1xf32, #tpu.memory_space<vmem>>, %arg8: memref<4x8xf32, #tpu.memory_space<vmem>>) attributes {dimension_semantics = [#tpu.dimension_semantics<parallel>], iteration_bounds = array<i64: 1>, scalar_prefetch = 0 : i64, scratch_operands = 0 : i64, tpu.core_type = #tpu.core_type<tc>, window_params = [{transform_indices = @transform_0, window_bounds = array<i64: 8, 8>}, {pipeline_mode = #tpu.pipeline_mode<synchronous>, transform_indices = @transform_1, window_bounds = array<i64: 50, 8>}, {pipeline_mode = #tpu.pipeline_mode<synchronous>, transform_indices = @transform_2, window_bounds = array<i64: 50, 1>}, {pipeline_mode = #tpu.pipeline_mode<synchronous>, transform_indices = @transform_3, window_bounds = array<i64: 25, 50>}, {pipeline_mode = #tpu.pipeline_mode<synchronous>, transform_indices = @transform_4, window_bounds = array<i64: 25, 1>}, {pipeline_mode = #tpu.pipeline_mode<synchronous>, transform_indices = @transform_5, window_bounds = array<i64: 4, 25>}, {pipeline_mode = #tpu.pipeline_mode<synchronous>, transform_indices = @transform_6, window_bounds = array<i64: 4, 1>}, {transform_indices = @transform_7, window_bounds = array<i64: 4, 8>}]} {
    %c0 = arith.constant 0 : index
    %c0_0 = arith.constant 0 : index
    %0 = vector.load %arg1[%c0, %c0_0] : memref<8x8xf32, #tpu.memory_space<vmem>>, vector<8x8xf32>
    %c0_1 = arith.constant 0 : index
    %c0_2 = arith.constant 0 : index
    %1 = vector.load %arg2[%c0_1, %c0_2] : memref<50x8xf32, #tpu.memory_space<vmem>>, vector<50x8xf32>
    %cst = arith.constant dense<0.000000e+00> : vector<50x8xf32>
    %2 = tpu.matmul %1, %0, %cst {dimension_numbers = #tpu.dot_dimension_numbers<[1], [0], [0], [1], [0, 0, 1, 1], [], []>} : vector<50x8xf32>, vector<8x8xf32>, vector<50x8xf32> -> vector<50x8xf32>
    %c0_3 = arith.constant 0 : index
    %c0_4 = arith.constant 0 : index
    %3 = vector.load %arg3[%c0_3, %c0_4] : memref<50x1xf32, #tpu.memory_space<vmem>>, vector<50x1xf32>
    %4 = vector.broadcast %3 : vector<50x1xf32> to vector<50x8xf32>
    %5 = arith.addf %2, %4 : vector<50x8xf32>
    %cst_5 = arith.constant 0.000000e+00 : f32
    %6 = vector.broadcast %cst_5 : f32 to vector<50x8xf32>
    %7 = arith.maximumf %5, %6 : vector<50x8xf32>
    %c0_6 = arith.constant 0 : index
    %c0_7 = arith.constant 0 : index
    %8 = vector.load %arg4[%c0_6, %c0_7] : memref<25x50xf32, #tpu.memory_space<vmem>>, vector<25x50xf32>
    %cst_8 = arith.constant dense<0.000000e+00> : vector<25x8xf32>
    %9 = tpu.matmul %8, %7, %cst_8 {dimension_numbers = #tpu.dot_dimension_numbers<[1], [0], [0], [1], [0, 0, 1, 1], [], []>} : vector<25x50xf32>, vector<50x8xf32>, vector<25x8xf32> -> vector<25x8xf32>
    %c0_9 = arith.constant 0 : index
    %c0_10 = arith.constant 0 : index
    %10 = vector.load %arg5[%c0_9, %c0_10] : memref<25x1xf32, #tpu.memory_space<vmem>>, vector<25x1xf32>
    %11 = vector.broadcast %10 : vector<25x1xf32> to vector<25x8xf32>
    %12 = arith.addf %9, %11 : vector<25x8xf32>
    %cst_11 = arith.constant 0.000000e+00 : f32
    %13 = vector.broadcast %cst_11 : f32 to vector<25x8xf32>
    %14 = arith.maximumf %12, %13 : vector<25x8xf32>
    %c0_12 = arith.constant 0 : index
    %c0_13 = arith.constant 0 : index
    %15 = vector.load %arg6[%c0_12, %c0_13] : memref<4x25xf32, #tpu.memory_space<vmem>>, vector<4x25xf32>
    %cst_14 = arith.constant dense<0.000000e+00> : vector<4x8xf32>
    %16 = tpu.matmul %15, %14, %cst_14 {dimension_numbers = #tpu.dot_dimension_numbers<[1], [0], [0], [1], [0, 0, 1, 1], [], []>} : vector<4x25xf32>, vector<25x8xf32>, vector<4x8xf32> -> vector<4x8xf32>
    %c0_15 = arith.constant 0 : index
    %c0_16 = arith.constant 0 : index
    %17 = vector.load %arg7[%c0_15, %c0_16] : memref<4x1xf32, #tpu.memory_space<vmem>>, vector<4x1xf32>
    %18 = vector.broadcast %17 : vector<4x1xf32> to vector<4x8xf32>
    %19 = arith.addf %16, %18 : vector<4x8xf32>
    %c0_17 = arith.constant 0 : index
    %c0_18 = arith.constant 0 : index
    %20 = vector.load %arg8[%c0_17, %c0_18] : memref<4x8xf32, #tpu.memory_space<vmem>>, vector<4x8xf32>
    tpu.vector_store %arg8[%c0_17, %c0_18], %19 {strides = array<i32>} : memref<4x8xf32, #tpu.memory_space<vmem>>, vector<4x8xf32>,
    return
  }
  func.func @transform_0(%arg0: i32) -> (i32, i32) {
    %c0_i32 = arith.constant 0 : i32
    %c0_i32_0 = arith.constant 0 : i32
    return %c0_i32, %arg0 : i32, i32
  }
  func.func @transform_1(%arg0: i32) -> (i32, i32) {
    %c0_i32 = arith.constant 0 : i32
    %c0_i32_0 = arith.constant 0 : i32
    %c0_i32_1 = arith.constant 0 : i32
    return %c0_i32, %c0_i32_0 : i32, i32
  }
  func.func @transform_2(%arg0: i32) -> (i32, i32) {
    %c0_i32 = arith.constant 0 : i32
    %c0_i32_0 = arith.constant 0 : i32
    %c0_i32_1 = arith.constant 0 : i32
    return %c0_i32, %c0_i32_0 : i32, i32
  }
  func.func @transform_3(%arg0: i32) -> (i32, i32) {
    %c0_i32 = arith.constant 0 : i32
    %c0_i32_0 = arith.constant 0 : i32
    %c0_i32_1 = arith.constant 0 : i32
    return %c0_i32, %c0_i32_0 : i32, i32
  }
  func.func @transform_4(%arg0: i32) -> (i32, i32) {
    %c0_i32 = arith.constant 0 : i32
    %c0_i32_0 = arith.constant 0 : i32
    %c0_i32_1 = arith.constant 0 : i32
    return %c0_i32, %c0_i32_0 : i32, i32
  }
  func.func @transform_5(%arg0: i32) -> (i32, i32) {
    %c0_i32 = arith.constant 0 : i32
    %c0_i32_0 = arith.constant 0 : i32
    %c0_i32_1 = arith.constant 0 : i32
    return %c0_i32, %c0_i32_0 : i32, i32
  }
  func.func @transform_6(%arg0: i32) -> (i32, i32) {
    %c0_i32 = arith.constant 0 : i32
    %c0_i32_0 = arith.constant 0 : i32
    %c0_i32_1 = arith.constant 0 : i32
    return %c0_i32, %c0_i32_0 : i32, i32
  }
  func.func @transform_7(%arg0: i32) -> (i32, i32) {
    %c0_i32 = arith.constant 0 : i32
    %c0_i32_0 = arith.constant 0 : i32
    return %c0_i32, %arg0 : i32, i32
  }
}

</mosaic_0001>

<llo_original>
// kernel: stock_predictor_forward.1
$region0: #{stock_predictor_forward.1}
  #allocation0 [shape = 'u32[]', space=smem, size = 0x4, offset = 0x4, fixed_abs, tag = 'smem constant byte address 0x4 - core index']
  #allocation1 [shape = 'u32[144,128]{1,0:T(1,128)}', space=vmem, size = 0x12000, scoped, tag = 'internal scratch']
  %s0 = inlined_call_operand.vmem [shape: f32[8,8], index: 0, kind: input, shape index: {}]
  %s1 = inlined_call_operand.vmem [shape: f32[50,8], index: 1, kind: input, shape index: {}]
  %s2 = inlined_call_operand.vmem [shape: f32[50,1], index: 2, kind: input, shape index: {}]
  %s3 = inlined_call_operand.vmem [shape: f32[25,50], index: 3, kind: input, shape index: {}]
  %s4 = inlined_call_operand.vmem [shape: f32[25,1], index: 4, kind: input, shape index: {}]
  %s5 = inlined_call_operand.vmem [shape: f32[4,25], index: 5, kind: input, shape index: {}]
  %s6 = inlined_call_operand.vmem [shape: f32[4,1], index: 6, kind: input, shape index: {}]
  %s7 = inlined_call_operand.hbm [shape: f32[4,8], index: 7, kind: output, shape index: {}]
  %s8 = sld [smem:[#allocation0]]
  $region38: #{stock_predictor_forward.1} parent=0
    _
  %s10 = ssub.s32 1, %s8
  %s11 = scalar_select 0, %s10, %s8
  $region1: #{stock_predictor_forward.1} parent=0
    #allocation2 [shape = 'u8[2048]{0}', space=vmem, size = 0x800, scoped, tag = 'output window, operand 0, single buffered']
    #allocation3 [shape = 's32[1]{0}', space=sflag, size = 0x4, scoped, tag = 'scoped memory for stock_predictor_forward.1']
    %12 = vsyncpa [#allocation3], 0
    // Predicated region
    $region2: #{stock_predictor_forward.1} parent=1 // pred_check
      _
    $region3: #{stock_predictor_forward.1} parent=1 // pred_check_branch
      %14 = sbr.rel (0) target = $region5
    $region4: #{stock_predictor_forward.1} parent=1 // pred_region
      _
    $region5: #{stock_predictor_forward.1} parent=1 // pred_fallthru
      _
    // Predicated region
    $region6: #{stock_predictor_forward.1} parent=1 // pred_check
      _
    $region7: #{stock_predictor_forward.1} parent=1 // pred_check_branch
      %16 = sbr.rel (0) target = $region9
    $region8: #{stock_predictor_forward.1} parent=1 // pred_region
      _
    $region9: #{stock_predictor_forward.1} parent=1 // pred_fallthru
      _
    // Predicated region
    $region10: #{stock_predictor_forward.1} parent=1 // pred_check
      _
    $region11: #{stock_predictor_forward.1} parent=1 // pred_check_branch
      %18 = sbr.rel (0) target = $region13
    $region12: #{stock_predictor_forward.1} parent=1 // pred_region
      _
    $region13: #{stock_predictor_forward.1} parent=1 // pred_fallthru
      _
    // Predicated region
    $region14: #{stock_predictor_forward.1} parent=1 // pred_check
      _
    $region15: #{stock_predictor_forward.1} parent=1 // pred_check_branch
      %20 = sbr.rel (0) target = $region17
    $region16: #{stock_predictor_forward.1} parent=1 // pred_region
      _
    $region17: #{stock_predictor_forward.1} parent=1 // pred_fallthru
      _
    // Predicated region
    $region18: #{stock_predictor_forward.1} parent=1 // pred_check
      _
    $region19: #{stock_predictor_forward.1} parent=1 // pred_check_branch
      %22 = sbr.rel (0) target = $region21
    $region20: #{stock_predictor_forward.1} parent=1 // pred_region
      _
    $region21: #{stock_predictor_forward.1} parent=1 // pred_fallthru
      _
    // Predicated region
    $region22: #{stock_predictor_forward.1} parent=1 // pred_check
      _
    $region23: #{stock_predictor_forward.1} parent=1 // pred_check_branch
      %24 = sbr.rel (0) target = $region25
    $region24: #{stock_predictor_forward.1} parent=1 // pred_region
      _
    $region25: #{stock_predictor_forward.1} parent=1 // pred_fallthru
      _
    // Predicated region
    $region26: #{stock_predictor_forward.1} parent=1 // pred_check
      _
    $region27: #{stock_predictor_forward.1} parent=1 // pred_check_branch
      %26 = sbr.rel (0) target = $region29
    $region28: #{stock_predictor_forward.1} parent=1 // pred_region
      _
    $region29: #{stock_predictor_forward.1} parent=1 // pred_fallthru
      _
    %v27 = vld [vmem:[%s0] sm:$0xff]
    %v28 = vld [vmem:[%s1] sm:$0xff]
    %v29 = vld [vmem:[%s1 + $0x8] sm:$0xff]
    %v30 = vld [vmem:[%s1 + $0x10] sm:$0xff]
    %v31 = vld [vmem:[%s1 + $0x18] sm:$0xff]
    %v32 = vld [vmem:[%s1 + $0x20] sm:$0xff]
    %v33 = vld [vmem:[%s1 + $0x28] sm:$0xff]
    %v34 = vld [vmem:[%s1 + $0x30] sm:$0x3]
    %v35 = vld [vmem:[%s2] sm:$0xff]
    %v36 = vld [vmem:[%s2 + $0x8] sm:$0xff]
    %v37 = vld [vmem:[%s2 + $0x10] sm:$0xff]
    %v38 = vld [vmem:[%s2 + $0x18] sm:$0xff]
    %v39 = vld [vmem:[%s2 + $0x20] sm:$0xff]
    %v40 = vld [vmem:[%s2 + $0x28] sm:$0xff]
    %v41 = vld [vmem:[%s2 + $0x30] sm:$0x3]
    %43 = vset.pattern.permute.xlu0 0
    %44 = vperm.xlu0 %43, %v35
    %v45 = vpop.permute.xlu0 %44
    %48 = vset.pattern.permute.xlu0 0
    %49 = vperm.xlu0 %48, %v36
    %v50 = vpop.permute.xlu0 %49
    %53 = vset.pattern.permute.xlu0 0
    %54 = vperm.xlu0 %53, %v37
    %v55 = vpop.permute.xlu0 %54
    %58 = vset.pattern.permute.xlu0 0
    %59 = vperm.xlu0 %58, %v38
    %v60 = vpop.permute.xlu0 %59
    %63 = vset.pattern.permute.xlu0 0
    %64 = vperm.xlu0 %63, %v39
    %v65 = vpop.permute.xlu0 %64
    %68 = vset.pattern.permute.xlu0 0
    %69 = vperm.xlu0 %68, %v40
    %v70 = vpop.permute.xlu0 %69
    %73 = vset.pattern.permute.xlu0 0
    %74 = vperm.xlu0 %73, %v41
    %v75 = vpop.permute.xlu0 %74
    %vm77 = vcmask 64512
    %v79 = vsel %vm77, %v28, 0
    %v82 = vsel %vm77, %v29, 0
    %v85 = vsel %vm77, %v30, 0
    %v88 = vsel %vm77, %v31, 0
    %v91 = vsel %vm77, %v32, 0
    %v94 = vsel %vm77, %v33, 0
    %v97 = vsel %vm77, %v34, 0
    %99 = vmatprep.subr.mxu0 0.0
    %100 = vmatpush1.msra.mxu0 %v27
    %101 = vmatprep.subr.mxu0 0.0
    %102 = vmatpush1.msra.mxu0 0.0
    %103 = vmatprep.subr.mxu0 0.0
    %104 = vmatpush1.msra.mxu0 0.0
    %105 = vmatprep.subr.mxu0 0.0
    %106 = vmatpush1.msra.mxu0 0.0
    %107 = vmatprep.subr.mxu0 0.0
    %108 = vmatpush1.msra.mxu0 0.0
    %109 = vmatprep.subr.mxu0 0.0
    %110 = vmatpush1.msra.mxu0 0.0
    %111 = vmatprep.subr.mxu0 0.0
    %112 = vmatpush1.msra.mxu0 0.0
    %113 = vmatprep.subr.mxu0 0.0
    %114 = vmatpush1.msra.mxu0 0.0
    %115 = vmatprep.subr.mxu0 0.0
    %116 = vmatpush1.msra.mxu0 0.0
    %117 = vmatprep.subr.mxu0 0.0
    %118 = vmatpush1.msra.mxu0 0.0
    %119 = vmatprep.subr.mxu0 0.0
    %120 = vmatpush1.msra.mxu0 0.0
    %121 = vmatprep.subr.mxu0 0.0
    %122 = vmatpush1.msra.mxu0 0.0
    %123 = vmatprep.subr.mxu0 0.0
    %124 = vmatpush1.msra.mxu0 0.0
    %125 = vmatprep.subr.mxu0 0.0
    %126 = vmatpush1.msra.mxu0 0.0
    %127 = vmatprep.subr.mxu0 0.0
    %128 = vmatpush1.msra.mxu0 0.0
    %129 = vmatprep.subr.mxu0 0.0
    %130 = vmatpush1.msra.mxu0 0.0
    %131 = vmatprep.subr.mxu0 0.0
    %132 = vmatpush1.msra.mxu0 0.0
    %133 = vmatprep.subr.mxu0 0.0
    %134 = vmatpush1.msra.mxu0 0.0
    %135 = vmatprep.subr.mxu0 0.0
    %136 = vmatpush1.msra.mxu0 0.0
    %137 = vmatprep.subr.mxu0 0.0
    %138 = vmatpush1.msra.mxu0 0.0
    %139 = vmatprep.subr.mxu0 0.0
    %140 = vmatpush1.msra.mxu0 0.0
    %141 = vmatprep.subr.mxu0 0.0
    %142 = vmatpush1.msra.mxu0 0.0
    %143 = vmatprep.subr.mxu0 0.0
    %144 = vmatpush1.msra.mxu0 0.0
    %145 = vmatprep.subr.mxu0 0.0
    %146 = vmatpush1.msra.mxu0 0.0
    %147 = vmatprep.subr.mxu0 0.0
    %148 = vmatpush1.msra.mxu0 0.0
    %149 = vmatprep.subr.mxu0 0.0
    %150 = vmatpush1.msra.mxu0 0.0
    %151 = vmatprep.subr.mxu0 0.0
    %152 = vmatpush1.msra.mxu0 0.0
    %153 = vmatprep.subr.mxu0 0.0
    %154 = vmatpush1.msra.mxu0 0.0
    %155 = vmatprep.subr.mxu0 0.0
    %156 = vmatpush1.msra.mxu0 0.0
    %157 = vmatprep.subr.mxu0 0.0
    %158 = vmatpush1.msra.mxu0 0.0
    %159 = vmatprep.subr.mxu0 0.0
    %160 = vmatpush1.msra.mxu0 0.0
    %161 = vmatprep.subr.mxu0 0.0
    %162 = vmatpush1.msra.mxu0 0.0
    %163 = vmatprep.mubr.f32.mxu0 0.0
    %164 = vmatmul.mubr.f32.gmra.mrb[0].mxu0 %v79
    %v165 = vpop.f32.mrb[0].mxu0
    %v166 = vadd.f32 %v45, %v165
    %v167 = vpop.f32.mrb[0].mxu0
    %168 = vmatprep.mubr.f32.mxu0 0.0
    %169 = vmatmul.mubr.f32.gmra.mrb[0].mxu0 %v82
    %v170 = vpop.f32.mrb[0].mxu0
    %v171 = vadd.f32 %v50, %v170
    %v172 = vpop.f32.mrb[0].mxu0
    %173 = vmatprep.mubr.f32.mxu0 0.0
    %174 = vmatmul.mubr.f32.gmra.mrb[0].mxu0 %v85
    %v175 = vpop.f32.mrb[0].mxu0
    %v176 = vadd.f32 %v55, %v175
    %v177 = vpop.f32.mrb[0].mxu0
    %178 = vmatprep.mubr.f32.mxu0 0.0
    %179 = vmatmul.mubr.f32.gmra.mrb[0].mxu0 %v88
    %v180 = vpop.f32.mrb[0].mxu0
    %v181 = vadd.f32 %v60, %v180
    %v182 = vpop.f32.mrb[0].mxu0
    %183 = vmatprep.mubr.f32.mxu0 0.0
    %184 = vmatmul.mubr.f32.gmra.mrb[0].mxu0 %v91
    %v185 = vpop.f32.mrb[0].mxu0
    %v186 = vadd.f32 %v65, %v185
    %v187 = vpop.f32.mrb[0].mxu0
    %188 = vmatprep.mubr.f32.mxu0 0.0
    %189 = vmatmul.mubr.f32.gmra.mrb[0].mxu0 %v94
    %v190 = vpop.f32.mrb[0].mxu0
    %v191 = vadd.f32 %v70, %v190
    %v192 = vpop.f32.mrb[0].mxu0
    %193 = vmatprep.mubr.f32.mxu0 0.0
    %194 = vmatmul.mubr.f32.gmra.mrb[0].mxu0 %v97
    %v195 = vpop.f32.mrb[0].mxu0
    %v196 = vadd.f32 %v75, %v195
    %v197 = vpop.f32.mrb[0].mxu0
    %198 = vdwg.mxu0
    %v199 = vmax.f32 %v166, 0.0
    %v200 = vmax.f32 %v171, 0.0
    %v201 = vmax.f32 %v176, 0.0
    %v202 = vmax.f32 %v181, 0.0
    %v203 = vmax.f32 %v186, 0.0
    %v204 = vmax.f32 %v191, 0.0
    %v205 = vmax.f32 %v196, 0.0
    %v206 = vld [vmem:[%s3] sm:$0xff]
    %v207 = vld [vmem:[%s3 + $0x8] sm:$0xff]
    %v208 = vld [vmem:[%s3 + $0x10] sm:$0xff]
    %v209 = vld [vmem:[%s3 + $0x18] sm:$0x1]
    %v210 = vld [vmem:[%s4] sm:$0xff]
    %v211 = vld [vmem:[%s4 + $0x8] sm:$0xff]
    %v212 = vld [vmem:[%s4 + $0x10] sm:$0xff]
    %v213 = vld [vmem:[%s4 + $0x18] sm:$0x1]
    %215 = vset.pattern.permute.xlu0 0
    %216 = vperm.xlu0 %215, %v210
    %v217 = vpop.permute.xlu0 %216
    %220 = vset.pattern.permute.xlu0 0
    %221 = vperm.xlu0 %220, %v211
    %v222 = vpop.permute.xlu0 %221
    %225 = vset.pattern.permute.xlu0 0
    %226 = vperm.xlu0 %225, %v212
    %v227 = vpop.permute.xlu0 %226
    %230 = vset.pattern.permute.xlu0 0
    %231 = vperm.xlu0 %230, %v213
    %v232 = vpop.permute.xlu0 %231
    %vm234 = vcmask 408576
    %v236 = vsel %vm234, %v206, 0
    %v239 = vsel %vm234, %v207, 0
    %v242 = vsel %vm234, %v208, 0
    %v245 = vsel %vm234, %v209, 0
    %vm247 = vcmask 1041408
    %v249 = vsel %vm247, %v205, 0
    %251 = vmatprep.subr.mxu0 0.0
    %252 = vmatpush1.msra.mxu0 %v199
    %253 = vmatprep.subr.mxu0 0.0
    %254 = vmatpush1.msra.mxu0 %v200
    %255 = vmatprep.subr.mxu0 0.0
    %256 = vmatpush1.msra.mxu0 %v201
    %257 = vmatprep.subr.mxu0 0.0
    %258 = vmatpush1.msra.mxu0 %v202
    %259 = vmatprep.subr.mxu0 0.0
    %260 = vmatpush1.msra.mxu0 %v203
    %261 = vmatprep.subr.mxu0 0.0
    %262 = vmatpush1.msra.mxu0 %v204
    %263 = vmatprep.subr.mxu0 0.0
    %264 = vmatpush1.msra.mxu0 %v249
    %265 = vmatprep.subr.mxu0 0.0
    %266 = vmatpush1.msra.mxu0 0.0
    %267 = vmatprep.subr.mxu0 0.0
    %268 = vmatpush1.msra.mxu0 0.0
    %269 = vmatprep.subr.mxu0 0.0
    %270 = vmatpush1.msra.mxu0 0.0
    %271 = vmatprep.subr.mxu0 0.0
    %272 = vmatpush1.msra.mxu0 0.0
    %273 = vmatprep.subr.mxu0 0.0
    %274 = vmatpush1.msra.mxu0 0.0
    %275 = vmatprep.subr.mxu0 0.0
    %276 = vmatpush1.msra.mxu0 0.0
    %277 = vmatprep.subr.mxu0 0.0
    %278 = vmatpush1.msra.mxu0 0.0
    %279 = vmatprep.subr.mxu0 0.0
    %280 = vmatpush1.msra.mxu0 0.0
    %281 = vmatprep.subr.mxu0 0.0
    %282 = vmatpush1.msra.mxu0 0.0
    %283 = vmatprep.subr.mxu0 0.0
    %284 = vmatpush1.msra.mxu0 0.0
    %285 = vmatprep.subr.mxu0 0.0
    %286 = vmatpush1.msra.mxu0 0.0
    %287 = vmatprep.subr.mxu0 0.0
    %288 = vmatpush1.msra.mxu0 0.0
    %289 = vmatprep.subr.mxu0 0.0
    %290 = vmatpush1.msra.mxu0 0.0
    %291 = vmatprep.subr.mxu0 0.0
    %292 = vmatpush1.msra.mxu0 0.0
    %293 = vmatprep.subr.mxu0 0.0
    %294 = vmatpush1.msra.mxu0 0.0
    %295 = vmatprep.subr.mxu0 0.0
    %296 = vmatpush1.msra.mxu0 0.0
    %297 = vmatprep.subr.mxu0 0.0
    %298 = vmatpush1.msra.mxu0 0.0
    %299 = vmatprep.subr.mxu0 0.0
    %300 = vmatpush1.msra.mxu0 0.0
    %301 = vmatprep.subr.mxu0 0.0
    %302 = vmatpush1.msra.mxu0 0.0
    %303 = vmatprep.subr.mxu0 0.0
    %304 = vmatpush1.msra.mxu0 0.0
    %305 = vmatprep.subr.mxu0 0.0
    %306 = vmatpush1.msra.mxu0 0.0
    %307 = vmatprep.subr.mxu0 0.0
    %308 = vmatpush1.msra.mxu0 0.0
    %309 = vmatprep.subr.mxu0 0.0
    %310 = vmatpush1.msra.mxu0 0.0
    %311 = vmatprep.subr.mxu0 0.0
    %312 = vmatpush1.msra.mxu0 0.0
    %313 = vmatprep.subr.mxu0 0.0
    %314 = vmatpush1.msra.mxu0 0.0
    %315 = vmatprep.mubr.f32.mxu0 0.0
    %316 = vmatmul.mubr.f32.gmra.mrb[0].mxu0 %v236
    %v317 = vpop.f32.mrb[0].mxu0
    %v318 = vadd.f32 %v217, %v317
    %v319 = vpop.f32.mrb[0].mxu0
    %320 = vmatprep.mubr.f32.mxu0 0.0
    %321 = vmatmul.mubr.f32.gmra.mrb[0].mxu0 %v239
    %v322 = vpop.f32.mrb[0].mxu0
    %v323 = vadd.f32 %v222, %v322
    %v324 = vpop.f32.mrb[0].mxu0
    %325 = vmatprep.mubr.f32.mxu0 0.0
    %326 = vmatmul.mubr.f32.gmra.mrb[0].mxu0 %v242
    %v327 = vpop.f32.mrb[0].mxu0
    %v328 = vadd.f32 %v227, %v327
    %v329 = vpop.f32.mrb[0].mxu0
    %330 = vmatprep.mubr.f32.mxu0 0.0
    %331 = vmatmul.mubr.f32.gmra.mrb[0].mxu0 %v245
    %v332 = vpop.f32.mrb[0].mxu0
    %v333 = vadd.f32 %v232, %v332
    %v334 = vpop.f32.mrb[0].mxu0
    %335 = vdwg.mxu0
    %v336 = vmax.f32 %v318, 0.0
    %v337 = vmax.f32 %v323, 0.0
    %v338 = vmax.f32 %v328, 0.0
    %v339 = vmax.f32 %v333, 0.0
    %v340 = vld [vmem:[%s5] sm:$0xf]
    %v341 = vld [vmem:[%s6] sm:$0xf]
    %343 = vset.pattern.permute.xlu0 0
    %344 = vperm.xlu0 %343, %v341
    %v345 = vpop.permute.xlu0 %344
    %vm347 = vcmask 203776
    %v349 = vsel %vm347, %v340, 0
    %vm351 = vcmask 1040384
    %v353 = vsel %vm351, %v339, 0
    %355 = vmatprep.subr.mxu0 0.0
    %356 = vmatpush1.msra.mxu0 %v336
    %357 = vmatprep.subr.mxu0 0.0
    %358 = vmatpush1.msra.mxu0 %v337
    %359 = vmatprep.subr.mxu0 0.0
    %360 = vmatpush1.msra.mxu0 %v338
    %361 = vmatprep.subr.mxu0 0.0
    %362 = vmatpush1.msra.mxu0 %v353
    %363 = vmatprep.subr.mxu0 0.0
    %364 = vmatpush1.msra.mxu0 0.0
    %365 = vmatprep.subr.mxu0 0.0
    %366 = vmatpush1.msra.mxu0 0.0
    %367 = vmatprep.subr.mxu0 0.0
    %368 = vmatpush1.msra.mxu0 0.0
    %369 = vmatprep.subr.mxu0 0.0
    %370 = vmatpush1.msra.mxu0 0.0
    %371 = vmatprep.subr.mxu0 0.0
    %372 = vmatpush1.msra.mxu0 0.0
    %373 = vmatprep.subr.mxu0 0.0
    %374 = vmatpush1.msra.mxu0 0.0
    %375 = vmatprep.subr.mxu0 0.0
    %376 = vmatpush1.msra.mxu0 0.0
    %377 = vmatprep.subr.mxu0 0.0
    %378 = vmatpush1.msra.mxu0 0.0
    %379 = vmatprep.subr.mxu0 0.0
    %380 = vmatpush1.msra.mxu0 0.0
    %381 = vmatprep.subr.mxu0 0.0
    %382 = vmatpush1.msra.mxu0 0.0
    %383 = vmatprep.subr.mxu0 0.0
    %384 = vmatpush1.msra.mxu0 0.0
    %385 = vmatprep.subr.mxu0 0.0
    %386 = vmatpush1.msra.mxu0 0.0
    %387 = vmatprep.subr.mxu0 0.0
    %388 = vmatpush1.msra.mxu0 0.0
    %389 = vmatprep.subr.mxu0 0.0
    %390 = vmatpush1.msra.mxu0 0.0
    %391 = vmatprep.subr.mxu0 0.0
    %392 = vmatpush1.msra.mxu0 0.0
    %393 = vmatprep.subr.mxu0 0.0
    %394 = vmatpush1.msra.mxu0 0.0
    %395 = vmatprep.subr.mxu0 0.0
    %396 = vmatpush1.msra.mxu0 0.0
    %397 = vmatprep.subr.mxu0 0.0
    %398 = vmatpush1.msra.mxu0 0.0
    %399 = vmatprep.subr.mxu0 0.0
    %400 = vmatpush1.msra.mxu0 0.0
    %401 = vmatprep.subr.mxu0 0.0
    %402 = vmatpush1.msra.mxu0 0.0
    %403 = vmatprep.subr.mxu0 0.0
    %404 = vmatpush1.msra.mxu0 0.0
    %405 = vmatprep.subr.mxu0 0.0
    %406 = vmatpush1.msra.mxu0 0.0
    %407 = vmatprep.subr.mxu0 0.0
    %408 = vmatpush1.msra.mxu0 0.0
    %409 = vmatprep.subr.mxu0 0.0
    %410 = vmatpush1.msra.mxu0 0.0
    %411 = vmatprep.subr.mxu0 0.0
    %412 = vmatpush1.msra.mxu0 0.0
    %413 = vmatprep.subr.mxu0 0.0
    %414 = vmatpush1.msra.mxu0 0.0
    %415 = vmatprep.subr.mxu0 0.0
    %416 = vmatpush1.msra.mxu0 0.0
    %417 = vmatprep.subr.mxu0 0.0
    %418 = vmatpush1.msra.mxu0 0.0
    %419 = vmatprep.mubr.f32.mxu0 0.0
    %420 = vmatmul.mubr.f32.gmra.mrb[0].mxu0 %v349
    %v421 = vpop.f32.mrb[0].mxu0
    %v422 = vadd.f32 %v345, %v421
    %v423 = vpop.f32.mrb[0].mxu0
    %424 = vdwg.mxu0
    %vm425 = vcmask 60416
    %426 = vst.msk [vmem:[#allocation2] sm:$0xf] %vm425, %v422
    // Predicated region
    $region30: #{stock_predictor_forward.1} parent=1 // pred_check
      _
    $region31: #{stock_predictor_forward.1} parent=1 // pred_check_branch
      %428 = sbr.rel (0) target = $region33
    $region32: #{stock_predictor_forward.1} parent=1 // pred_region
      %s430 = ssub.s32 64, 64
      %431 = vsyncadd [#allocation3], %s430
      %s433 = sshll.u32 [#allocation2], 4
      %s434 = int_to_ptr.vmem [resolvable:$true] %s433
      %436 = dma.vmem_to_hbm [thread:$0]  %s434, 64, %s7, [#allocation3]
    $region33: #{stock_predictor_forward.1} parent=1 // pred_fallthru
      _
    // Predicated region
    $region34: #{stock_predictor_forward.1} parent=1 // pred_check
      _
    $region35: #{stock_predictor_forward.1} parent=1 // pred_check_branch
      %438 = sbr.rel (0) target = $region37
    $region36: #{stock_predictor_forward.1} parent=1 // pred_region
      %439 = dma.done [#allocation3], 64
    $region37: #{stock_predictor_forward.1} parent=1 // pred_fallthru
      _
    %440 = vsyncpa [#allocation3], 1

</llo_original>
